<compile_context>
chip_gen: v7x
topology: tpu7x:2x2x1
jax: 0.10.0
libtpu: 0.0.40
codegen_flags: <defaults>
</compile_context>

<pallas_src>
import jax
import jax.numpy as jnp
from jax.experimental import pallas as pl
from jax.experimental.pallas import tpu as pltpu


def _round_up(n, m):
    return (n + m - 1) // m * m


def stair_net_kernel(x_ref, w1_ref, b1_ref, w2_ref, b2_ref, o_ref):
    # One batch tile: two MXU matmuls (bf16 inputs, f32 accumulation) + EUP sigmoid.
    x = x_ref[...].astype(jnp.bfloat16)
    h = jnp.dot(x, w1_ref[...], preferred_element_type=jnp.float32) + b1_ref[...]
    # Sigmoid entirely on the EUP slot: exp + approx reciprocal (f32 elementwise).
    h_sigm = pl.reciprocal(1.0 + jnp.exp(-h), approx=True)
    y = jnp.dot(h_sigm.astype(jnp.bfloat16), w2_ref[...],
                preferred_element_type=jnp.float32) + b2_ref[...]
    o_ref[...] = y.astype(o_ref.dtype)


def stair_net_forward(x, w1, b1, w2, b2, *, tile_b=128):
    """y = Linear2(sigmoid(Linear1(x))).

    x: (B, D_in) f32; w1: (D_in, H); b1: (H,); w2: (H, D_out); b2: (D_out,).
    Weights are pre-transposed to (in_features, out_features).
    """
    B, D_in = x.shape
    H = w1.shape[1]
    D_out = w2.shape[1]

    # Lane-dense feature dims (avoid masked vst / empty MXU columns).
    H_pad = _round_up(H, 128)
    D_out_pad = _round_up(D_out, 128)

    # Batch tiling: tile_b rows per grid step (full MXU height when B allows).
    tb = min(tile_b, _round_up(B, 8))
    B_pad = _round_up(B, tb)

    x_p = jnp.pad(x, ((0, B_pad - B), (0, 0)))

    # Zero padding is inert: padded H columns give sigmoid(b1_pad=0)=0.5 but
    # multiply zero rows of w2; padded D_out columns are sliced off below.
    # Weights -> bf16 (MXU-native, halves weight DMA); biases stay f32.
    w1_p = jnp.pad(w1, ((0, 0), (0, H_pad - H))).astype(jnp.bfloat16)
    w2_p = jnp.pad(w2, ((0, H_pad - H), (0, D_out_pad - D_out))).astype(jnp.bfloat16)
    b1_p = jnp.pad(b1, (0, H_pad - H)).reshape(1, H_pad).astype(jnp.float32)
    b2_p = jnp.pad(b2, (0, D_out_pad - D_out)).reshape(1, D_out_pad).astype(jnp.float32)

    bytes_accessed = (x_p.size * x_p.dtype.itemsize
                      + w1_p.size * 2 + w2_p.size * 2
                      + b1_p.size * 4 + b2_p.size * 4
                      + B_pad * D_out_pad * x.dtype.itemsize)

    out = pl.pallas_call(
        stair_net_kernel,
        out_shape=jax.ShapeDtypeStruct((B_pad, D_out_pad), x.dtype),
        grid=(B_pad // tb,),
        in_specs=[
            pl.BlockSpec((tb, D_in), lambda i: (i, 0)),      # x: streamed per batch tile
            pl.BlockSpec((D_in, H_pad), lambda i: (0, 0)),   # w1: VMEM-resident
            pl.BlockSpec((1, H_pad), lambda i: (0, 0)),      # b1: VMEM-resident
            pl.BlockSpec((H_pad, D_out_pad), lambda i: (0, 0)),  # w2: VMEM-resident
            pl.BlockSpec((1, D_out_pad), lambda i: (0, 0)),  # b2: VMEM-resident
        ],
        out_specs=pl.BlockSpec((tb, D_out_pad), lambda i: (i, 0)),
        compiler_params=pltpu.CompilerParams(
            dimension_semantics=("parallel",),      # shard batch tiles across TCs (v7x)
            vmem_limit_bytes=32 * 1024 * 1024,      # explicit budget; safe on 64 MiB v7x
        ),
        cost_estimate=pl.CostEstimate(
            flops=2 * B_pad * (D_in * H_pad + H_pad * D_out_pad),
            transcendentals=B_pad * H_pad,
            bytes_accessed=bytes_accessed,
        ),
    )(x_p, w1_p, b1_p, w2_p, b2_p)

    return out[:B, :D_out]


def init_params(key, D_in, H, D_out, dtype=jnp.float32):
    """Deterministic init mimicking torch.nn.Linear (U[-1/sqrt(fan_in), ...]),
    with weights stored pre-transposed as (in_features, out_features)."""
    k1, k2, k3, k4 = jax.random.split(key, 4)
    bound1 = 1.0 / (D_in ** 0.5)
    bound2 = 1.0 / (H ** 0.5)
    w1 = jax.random.uniform(k1, (D_in, H), dtype, -bound1, bound1)
    b1 = jax.random.uniform(k2, (H,), dtype, -bound1, bound1)
    w2 = jax.random.uniform(k3, (H, D_out), dtype, -bound2, bound2)
    b2 = jax.random.uniform(k4, (D_out,), dtype, -bound2, bound2)
    return w1, b1, w2, b2


if __name__ == "__main__":
    key = jax.random.PRNGKey(0)
    kx, kp = jax.random.split(key)

    # Small model dims matching the module; batch of 256 exercises the batch
    # tiling (two 128-row grid steps with resident weights).
    B, D_in, H, D_out = 256, 32, 64, 16
    x = jax.random.normal(kx, (B, D_in), jnp.float32)
    w1, b1, w2, b2 = init_params(kp, D_in, H, D_out)

    y = stair_net_forward(x, w1, b1, w2, b2)
    jax.block_until_ready(y)

    # Pure-JAX f32 reference (kernel uses bf16 matmul inputs -> loose tol).
    h_ref = jax.nn.sigmoid(x @ w1 + b1)
    y_ref = h_ref @ w2 + b2
    assert y.shape == y_ref.shape
    max_err = float(jnp.max(jnp.abs(y - y_ref)))
    assert jnp.allclose(y, y_ref, atol=2e-2, rtol=2e-2), max_err

    print("KERNEL_OK")
</pallas_src>

<mosaic_0001>
module attributes {stable_mosaic.version = 11 : i64} {
  func.func @stair_net_kernel(%arg0: i32, %arg1: memref<128x32xf32, #tpu.memory_space<vmem>>, %arg2: memref<32x128xbf16, #tpu.memory_space<vmem>>, %arg3: memref<1x128xf32, #tpu.memory_space<vmem>>, %arg4: memref<128x128xbf16, #tpu.memory_space<vmem>>, %arg5: memref<1x128xf32, #tpu.memory_space<vmem>>, %arg6: memref<128x128xf32, #tpu.memory_space<vmem>>) attributes {dimension_semantics = [#tpu.dimension_semantics<parallel>], iteration_bounds = array<i64: 2>, scalar_prefetch = 0 : i64, scratch_operands = 0 : i64, tpu.core_type = #tpu.core_type<tc>, window_params = [{transform_indices = @transform_0, window_bounds = array<i64: 128, 32>}, {pipeline_mode = #tpu.pipeline_mode<synchronous>, transform_indices = @transform_1, window_bounds = array<i64: 32, 128>}, {pipeline_mode = #tpu.pipeline_mode<synchronous>, transform_indices = @transform_2, window_bounds = array<i64: 1, 128>}, {pipeline_mode = #tpu.pipeline_mode<synchronous>, transform_indices = @transform_3, window_bounds = array<i64: 128, 128>}, {pipeline_mode = #tpu.pipeline_mode<synchronous>, transform_indices = @transform_4, window_bounds = array<i64: 1, 128>}, {transform_indices = @transform_5, window_bounds = array<i64: 128, 128>}]} {
    %c0 = arith.constant 0 : index
    %c0_0 = arith.constant 0 : index
    %0 = vector.load %arg1[%c0, %c0_0] : memref<128x32xf32, #tpu.memory_space<vmem>>, vector<128x32xf32>
    %1 = arith.truncf %0 : vector<128x32xf32> to vector<128x32xbf16>
    %c0_1 = arith.constant 0 : index
    %c0_2 = arith.constant 0 : index
    %2 = vector.load %arg2[%c0_1, %c0_2] : memref<32x128xbf16, #tpu.memory_space<vmem>>, vector<32x128xbf16>
    %cst = arith.constant dense<0.000000e+00> : vector<128x128xf32>
    %3 = tpu.matmul %1, %2, %cst {dimension_numbers = #tpu.dot_dimension_numbers<[1], [0], [0], [1], [0, 0, 1, 1], [], []>} : vector<128x32xbf16>, vector<32x128xbf16>, vector<128x128xf32> -> vector<128x128xf32>
    %c0_3 = arith.constant 0 : index
    %c0_4 = arith.constant 0 : index
    %4 = vector.load %arg3[%c0_3, %c0_4] : memref<1x128xf32, #tpu.memory_space<vmem>>, vector<1x128xf32>
    %5 = vector.broadcast %4 : vector<1x128xf32> to vector<128x128xf32>
    %6 = arith.addf %3, %5 : vector<128x128xf32>
    %cst_5 = arith.constant 0.000000e+00 : f32
    %7 = vector.broadcast %cst_5 : f32 to vector<128x128xf32>
    %8 = arith.subf %7, %6 : vector<128x128xf32>
    %9 = math.exp %8 : vector<128x128xf32>
    %cst_6 = arith.constant 1.000000e+00 : f32
    %10 = vector.broadcast %cst_6 : f32 to vector<128x128xf32>
    %11 = arith.addf %10, %9 : vector<128x128xf32>
    %12 = tpu.reciprocal %11 {approx = true} : vector<128x128xf32> -> vector<128x128xf32>
    %13 = arith.truncf %12 : vector<128x128xf32> to vector<128x128xbf16>
    %c0_7 = arith.constant 0 : index
    %c0_8 = arith.constant 0 : index
    %14 = vector.load %arg4[%c0_7, %c0_8] : memref<128x128xbf16, #tpu.memory_space<vmem>>, vector<128x128xbf16>
    %cst_9 = arith.constant dense<0.000000e+00> : vector<128x128xf32>
    %15 = tpu.matmul %13, %14, %cst_9 {dimension_numbers = #tpu.dot_dimension_numbers<[1], [0], [0], [1], [0, 0, 1, 1], [], []>} : vector<128x128xbf16>, vector<128x128xbf16>, vector<128x128xf32> -> vector<128x128xf32>
    %c0_10 = arith.constant 0 : index
    %c0_11 = arith.constant 0 : index
    %16 = vector.load %arg5[%c0_10, %c0_11] : memref<1x128xf32, #tpu.memory_space<vmem>>, vector<1x128xf32>
    %17 = vector.broadcast %16 : vector<1x128xf32> to vector<128x128xf32>
    %18 = arith.addf %15, %17 : vector<128x128xf32>
    %c0_12 = arith.constant 0 : index
    %c0_13 = arith.constant 0 : index
    %19 = vector.load %arg6[%c0_12, %c0_13] : memref<128x128xf32, #tpu.memory_space<vmem>>, vector<128x128xf32>
    tpu.vector_store %arg6[%c0_12, %c0_13], %18 {strides = array<i32>} : memref<128x128xf32, #tpu.memory_space<vmem>>, vector<128x128xf32>,
    return
  }
  func.func @transform_0(%arg0: i32) -> (i32, i32) {
    %c0_i32 = arith.constant 0 : i32
    %c0_i32_0 = arith.constant 0 : i32
    return %arg0, %c0_i32 : i32, i32
  }
  func.func @transform_1(%arg0: i32) -> (i32, i32) {
    %c0_i32 = arith.constant 0 : i32
    %c0_i32_0 = arith.constant 0 : i32
    %c0_i32_1 = arith.constant 0 : i32
    return %c0_i32, %c0_i32_0 : i32, i32
  }
  func.func @transform_2(%arg0: i32) -> (i32, i32) {
    %c0_i32 = arith.constant 0 : i32
    %c0_i32_0 = arith.constant 0 : i32
    %c0_i32_1 = arith.constant 0 : i32
    return %c0_i32, %c0_i32_0 : i32, i32
  }
  func.func @transform_3(%arg0: i32) -> (i32, i32) {
    %c0_i32 = arith.constant 0 : i32
    %c0_i32_0 = arith.constant 0 : i32
    %c0_i32_1 = arith.constant 0 : i32
    return %c0_i32, %c0_i32_0 : i32, i32
  }
  func.func @transform_4(%arg0: i32) -> (i32, i32) {
    %c0_i32 = arith.constant 0 : i32
    %c0_i32_0 = arith.constant 0 : i32
    %c0_i32_1 = arith.constant 0 : i32
    return %c0_i32, %c0_i32_0 : i32, i32
  }
  func.func @transform_5(%arg0: i32) -> (i32, i32) {
    %c0_i32 = arith.constant 0 : i32
    %c0_i32_0 = arith.constant 0 : i32
    return %arg0, %c0_i32 : i32, i32
  }
}

</mosaic_0001>

<llo_original>
// kernel: tpu_custom_call.1
$region0: #{tpu_custom_call.1}
  #allocation0 [shape = 'u32[]', space=smem, size = 0x4, offset = 0x4, fixed_abs, tag = 'smem constant byte address 0x4 - core index']
  #allocation1 [shape = 'u32[144,128]{1,0:T(1,128)}', space=vmem, size = 0x12000, scoped, tag = 'internal scratch']
  %s0 = inlined_call_operand.vmem [shape: f32[256,32], index: 0, kind: input, shape index: {}]
  %s1 = inlined_call_operand.vmem [shape: bf16[32,128], index: 1, kind: input, shape index: {}]
  %s2 = inlined_call_operand.vmem [shape: f32[1,128], index: 2, kind: input, shape index: {}]
  %s3 = inlined_call_operand.vmem [shape: bf16[128,128], index: 3, kind: input, shape index: {}]
  %s4 = inlined_call_operand.vmem [shape: f32[1,128], index: 4, kind: input, shape index: {}]
  %s5 = inlined_call_operand.hbm [shape: f32[256,128], index: 5, kind: output, shape index: {}]
  %s6 = sld [smem:[#allocation0]]
  $region53: #{tpu_custom_call.1} parent=0
    _
  %s8 = ssub.s32 1, %s6
  %s9 = scalar_select 0, %s8, %s6
  $region1: #{tpu_custom_call.1} parent=0
    #allocation2 [shape = 'u8[131072]{0}', space=vmem, size = 0x20000, scoped, tag = 'output window, operand 0']
    #allocation3 [shape = 's32[2]{0}', space=sflag, size = 0x8, scoped, tag = 'scoped memory for tpu_custom_call.1']
    %10 = vsyncpa [#allocation3], 0
    %s11 = scalar_lea.sflag [#allocation3], 1
    %12 = vsyncpa %s11, 0
    loop: start=0, step=1, limit=4
    $region2: #{tpu_custom_call.1} parent=1 // loop_pre_header
      _
    $region3: #{tpu_custom_call.1} parent=1 // loop_header
      %s14 = sphi 0, %s18
      %p15 = scmp.ge.s32.totalorder %s14, 4
      %s24 = sphi 0, %s26
      %s27 = sphi 0, %s24
      %s28 = sphi 0, %s27
      %s44 = sphi 0, %s28
      %s48 = sphi 0, %s48
      %s50 = sphi 0, %s48
      %s51 = sphi 0, %s50
      %s65 = sphi 0, %s51
      %s69 = sphi 0, %s69
      %s71 = sphi 0, %s69
      %s72 = sphi 0, %s71
      %s86 = sphi 0, %s72
      %s90 = sphi 0, %s90
      %s92 = sphi 0, %s90
      %s93 = sphi 0, %s92
      %s107 = sphi 0, %s93
      %s111 = sphi 0, %s111
      %s113 = sphi 0, %s111
      %s114 = sphi 0, %s113
      %s128 = sphi 0, %s114
      %s134 = sphi 0, %s136
      %s137 = sphi 0, %s134
      %s138 = sphi 0, %s137
      %s154 = sphi 0, %s138
    $region4: #{tpu_custom_call.1} parent=1 // loop_header_branch
      %17 = sbr.rel (%p15) target = $region8
    $region5: #{tpu_custom_call.1} parent=1 // loop_body
      %s19 = ssub.s32 %s14, 1
      %s20 = ssub.s32 %s14, 2
      %s21 = sadd.s32 %s14, 1
      %s22 = ssub.s32 %s14, %s21
      %p23 = scmp.eq.s32.totalorder %s22, 0
      %s25 = sadd.s32 %s24, 1
      %s26 = scalar_select %p23, %s24, %s25
      %p29 = pneg %p23
      %p30 = scmp.eq.s32.totalorder %s14, 1
      %p31 = por %p29, %p30
      %p32 = scmp.ne.s32.totalorder %s24, %s27
      %p33 = scmp.eq.s32.totalorder %s14, 0
      %p34 = por %p32, %p33
      %p35 = scmp.ne.s32.totalorder %s24, %s27
      %p36 = scmp.eq.s32.totalorder %s19, 1
      %p37 = por %p35, %p36
      %p38 = scmp.ne.s32.totalorder %s27, %s28
      %p39 = scmp.eq.s32.totalorder %s19, 0
      %p40 = por %p38, %p39
      %p41 = scmp.ne.s32.totalorder %s27, %s28
      %p42 = scmp.eq.s32.totalorder %s20, 1
      %p43 = por %p41, %p42
      %p45 = scmp.ne.s32.totalorder %s28, %s44
      %p46 = scmp.eq.s32.totalorder %s20, 0
      %p47 = por %p45, %p46
      %s49 = sadd.s32 %s48, 1
      %p52 = scmp.eq.s32.totalorder %s14, 1
      %p53 = scmp.ne.s32.totalorder %s48, %s50
      %p54 = scmp.eq.s32.totalorder %s14, 0
      %p55 = por %p53, %p54
      %p56 = scmp.ne.s32.totalorder %s48, %s50
      %p57 = scmp.eq.s32.totalorder %s19, 1
      %p58 = por %p56, %p57
      %p59 = scmp.ne.s32.totalorder %s50, %s51
      %p60 = scmp.eq.s32.totalorder %s19, 0
      %p61 = por %p59, %p60
      %p62 = scmp.ne.s32.totalorder %s50, %s51
      %p63 = scmp.eq.s32.totalorder %s20, 1
      %p64 = por %p62, %p63
      %p66 = scmp.ne.s32.totalorder %s51, %s65
      %p67 = scmp.eq.s32.totalorder %s20, 0
      %p68 = por %p66, %p67
      %s70 = sadd.s32 %s69, 1
      %p73 = scmp.eq.s32.totalorder %s14, 1
      %p74 = scmp.ne.s32.totalorder %s69, %s71
      %p75 = scmp.eq.s32.totalorder %s14, 0
      %p76 = por %p74, %p75
      %p77 = scmp.ne.s32.totalorder %s69, %s71
      %p78 = scmp.eq.s32.totalorder %s19, 1
      %p79 = por %p77, %p78
      %p80 = scmp.ne.s32.totalorder %s71, %s72
      %p81 = scmp.eq.s32.totalorder %s19, 0
      %p82 = por %p80, %p81
      %p83 = scmp.ne.s32.totalorder %s71, %s72
      %p84 = scmp.eq.s32.totalorder %s20, 1
      %p85 = por %p83, %p84
      %p87 = scmp.ne.s32.totalorder %s72, %s86
      %p88 = scmp.eq.s32.totalorder %s20, 0
      %p89 = por %p87, %p88
      %s91 = sadd.s32 %s90, 1
      %p94 = scmp.eq.s32.totalorder %s14, 1
      %p95 = scmp.ne.s32.totalorder %s90, %s92
      %p96 = scmp.eq.s32.totalorder %s14, 0
      %p97 = por %p95, %p96
      %p98 = scmp.ne.s32.totalorder %s90, %s92
      %p99 = scmp.eq.s32.totalorder %s19, 1
      %p100 = por %p98, %p99
      %p101 = scmp.ne.s32.totalorder %s92, %s93
      %p102 = scmp.eq.s32.totalorder %s19, 0
      %p103 = por %p101, %p102
      %p104 = scmp.ne.s32.totalorder %s92, %s93
      %p105 = scmp.eq.s32.totalorder %s20, 1
      %p106 = por %p104, %p105
      %p108 = scmp.ne.s32.totalorder %s93, %s107
      %p109 = scmp.eq.s32.totalorder %s20, 0
      %p110 = por %p108, %p109
      %s112 = sadd.s32 %s111, 1
      %p115 = scmp.eq.s32.totalorder %s14, 1
      %p116 = scmp.ne.s32.totalorder %s111, %s113
      %p117 = scmp.eq.s32.totalorder %s14, 0
      %p118 = por %p116, %p117
      %p119 = scmp.ne.s32.totalorder %s111, %s113
      %p120 = scmp.eq.s32.totalorder %s19, 1
      %p121 = por %p119, %p120
      %p122 = scmp.ne.s32.totalorder %s113, %s114
      %p123 = scmp.eq.s32.totalorder %s19, 0
      %p124 = por %p122, %p123
      %p125 = scmp.ne.s32.totalorder %s113, %s114
      %p126 = scmp.eq.s32.totalorder %s20, 1
      %p127 = por %p125, %p126
      %p129 = scmp.ne.s32.totalorder %s114, %s128
      %p130 = scmp.eq.s32.totalorder %s20, 0
      %p131 = por %p129, %p130
      %s132 = ssub.s32 %s14, %s21
      %p133 = scmp.eq.s32.totalorder %s132, 0
      %s135 = sadd.s32 %s134, 1
      %s136 = scalar_select %p133, %s134, %s135
      %p139 = pneg %p133
      %p140 = scmp.eq.s32.totalorder %s14, 1
      %p141 = por %p139, %p140
      %p142 = scmp.ne.s32.totalorder %s134, %s137
      %p143 = scmp.eq.s32.totalorder %s14, 0
      %p144 = por %p142, %p143
      %p145 = scmp.ne.s32.totalorder %s134, %s137
      %p146 = scmp.eq.s32.totalorder %s19, 1
      %p147 = por %p145, %p146
      %p148 = scmp.ne.s32.totalorder %s137, %s138
      %p149 = scmp.eq.s32.totalorder %s19, 0
      %p150 = por %p148, %p149
      %p151 = scmp.ne.s32.totalorder %s137, %s138
      %p152 = scmp.eq.s32.totalorder %s20, 1
      %p153 = por %p151, %p152
      %p155 = scmp.ne.s32.totalorder %s138, %s154
      %p156 = scmp.eq.s32.totalorder %s20, 0
      %p157 = por %p155, %p156
      %p158 = scmp.le.s32.totalorder 1, %s14
      %p159 = scmp.lt.s32.totalorder %s14, 3
      %p160 = pnand %p158, %p159
      %p161 = pneg %p160
      // Predicated region
      $region9: #{tpu_custom_call.1} parent=5 // pred_check
        _
      $region10: #{tpu_custom_call.1} parent=5 // pred_check_branch
        %163 = sbr.rel (%p160) target = $region12
      $region11: #{tpu_custom_call.1} parent=5 // pred_region
        %s164 = ssub.s32 %s14, 1
        // Predicated region
        $region13: #{tpu_custom_call.1} parent=11 // pred_check
          %p165 = pneg %p61
        $region14: #{tpu_custom_call.1} parent=11 // pred_check_branch
          %167 = sbr.rel (%p165) target = $region16
        $region15: #{tpu_custom_call.1} parent=11 // pred_region
          _
        $region16: #{tpu_custom_call.1} parent=11 // pred_fallthru
          _
        // Predicated region
        $region17: #{tpu_custom_call.1} parent=11 // pred_check
          %p168 = pneg %p82
        $region18: #{tpu_custom_call.1} parent=11 // pred_check_branch
          %170 = sbr.rel (%p168) target = $region20
        $region19: #{tpu_custom_call.1} parent=11 // pred_region
          _
        $region20: #{tpu_custom_call.1} parent=11 // pred_fallthru
          _
        // Predicated region
        $region21: #{tpu_custom_call.1} parent=11 // pred_check
          %p171 = pneg %p103
        $region22: #{tpu_custom_call.1} parent=11 // pred_check_branch
          %173 = sbr.rel (%p171) target = $region24
        $region23: #{tpu_custom_call.1} parent=11 // pred_region
          _
        $region24: #{tpu_custom_call.1} parent=11 // pred_fallthru
          _
        // Predicated region
        $region25: #{tpu_custom_call.1} parent=11 // pred_check
          %p174 = pneg %p124
        $region26: #{tpu_custom_call.1} parent=11 // pred_check_branch
          %176 = sbr.rel (%p174) target = $region28
        $region27: #{tpu_custom_call.1} parent=11 // pred_region
          _
        $region28: #{tpu_custom_call.1} parent=11 // pred_fallthru
          _
      $region12: #{tpu_custom_call.1} parent=5 // pred_fallthru
        _
      %p177 = scmp.lt.s32.totalorder %s14, 2
      // Predicated region
      $region29: #{tpu_custom_call.1} parent=5 // pred_check
        %p178 = pneg %p177
      $region30: #{tpu_custom_call.1} parent=5 // pred_check_branch
        %180 = sbr.rel (%p178) target = $region32
      $region31: #{tpu_custom_call.1} parent=5 // pred_region
        // Predicated region
        $region33: #{tpu_custom_call.1} parent=31 // pred_check
          %p181 = pneg %p34
        $region34: #{tpu_custom_call.1} parent=31 // pred_check_branch
          %183 = sbr.rel (%p181) target = $region36
        $region35: #{tpu_custom_call.1} parent=31 // pred_region
          %s184 = smul.u32 16, %s14
          %p185 = scmp.lt.s32.totalorder %s184, 31
          %s186 = scalar_select %p185, %s184, 31
          %s187 = smul.addr %s186, 8
          %s188 = scalar_lea.vmem %s0, %s187
          %s189 = smul.u32 16, %s14
        $region36: #{tpu_custom_call.1} parent=31 // pred_fallthru
          _
      $region32: #{tpu_custom_call.1} parent=5 // pred_fallthru
        _
      %p190 = scmp.le.s32.totalorder 1, %s14
      %p191 = scmp.lt.s32.totalorder %s14, 3
      %p192 = pnand %p190, %p191
      %p193 = pneg %p192
      // Predicated region
      $region37: #{tpu_custom_call.1} parent=5 // pred_check
        _
      $region38: #{tpu_custom_call.1} parent=5 // pred_check_branch
        %195 = sbr.rel (%p192) target = $region40
      $region39: #{tpu_custom_call.1} parent=5 // pred_region
        %s196 = ssub.s32 %s14, 1
        %s197 = smul.u32 16, %s19
        %p198 = scmp.lt.s32.totalorder %s197, 31
        %s199 = scalar_select %p198, %s197, 31
        %s200 = smul.addr %s199, 8
        %s201 = scalar_lea.vmem %s0, %s200
        %p202 = pneg %p40
        %p203 = pneg %p37
        %p204 = pneg %p61
        %p205 = pneg %p58
        %p206 = pneg %p82
        %p207 = pneg %p79
        %p208 = pneg %p103
        %p209 = pneg %p100
        %p210 = pneg %p124
        %p211 = pneg %p121
        %p212 = pneg %p150
        %p213 = pneg %p147
        %s214 = sand.u32 %s137, 1
        %s215 = scalar_lea.sflag [#allocation3], %s214
        %s216 = sand.u32 %s137, 1
        %s217 = smul.addr %s216, 128
        %s218 = scalar_lea.vmem [#allocation2], %s217
        %s219 = smul.u32 16, %s19
        %p220 = scmp.lt.s32.totalorder %s219, 31
        %s221 = scalar_select %p220, %s219, 31
        %s222 = smul.addr %s221, 8
        %s223 = scalar_lea.vmem %s0, %s222
        %s224 = smul.u32 16, %s19
        %s225 = smul.u32 16, %s19
        %v227 = vld [vmem:[%s223] sm:$0xff]
        %v228 = vld [vmem:[%s223 + $0x8] sm:$0xff]
        %v229 = vld [vmem:[%s223 + $0x10] sm:$0xff]
        %v230 = vld [vmem:[%s223 + $0x18] sm:$0xff]
        %v231 = vld [vmem:[%s223 + $0x20] sm:$0xff]
        %v232 = vld [vmem:[%s223 + $0x28] sm:$0xff]
        %v233 = vld [vmem:[%s223 + $0x30] sm:$0xff]
        %v234 = vld [vmem:[%s223 + $0x38] sm:$0xff]
        %v235 = vld [vmem:[%s223 + $0x40] sm:$0xff]
        %v236 = vld [vmem:[%s223 + $0x48] sm:$0xff]
        %v237 = vld [vmem:[%s223 + $0x50] sm:$0xff]
        %v238 = vld [vmem:[%s223 + $0x58] sm:$0xff]
        %v239 = vld [vmem:[%s223 + $0x60] sm:$0xff]
        %v240 = vld [vmem:[%s223 + $0x68] sm:$0xff]
        %v241 = vld [vmem:[%s223 + $0x70] sm:$0xff]
        %v242 = vld [vmem:[%s223 + $0x78] sm:$0xff]
        %v243 = vpack.c.bf16 %v228, %v227
        %v244 = vpack.c.bf16 %v230, %v229
        %v245 = vpack.c.bf16 %v232, %v231
        %v246 = vpack.c.bf16 %v234, %v233
        %v247 = vpack.c.bf16 %v236, %v235
        %v248 = vpack.c.bf16 %v238, %v237
        %v249 = vpack.c.bf16 %v240, %v239
        %v250 = vpack.c.bf16 %v242, %v241
        %v251 = vld [vmem:[%s1] sm:$0xf]
        %v252 = vld [vmem:[%s1 + $0x4] sm:$0xf]
        %v253 = vld [vmem:[%s1 + $0x8] sm:$0xf]
        %v254 = vld [vmem:[%s1 + $0xc] sm:$0xf]
        %v255 = vld [vmem:[%s2] sm:$0x1]
        %v257 = vlaneseq
        %v258 = vshrl.u32 %v257, 7
        %v259 = vsub.s32 0, %v258
        %v260 = vrot.slane %v255, %v259
        %v266 = vunpack.c.l.b16 %v251
        %v267 = vunpack.c.l.b16 %v252
        %v268 = vunpack.c.l.b16 %v253
        %v269 = vunpack.c.l.b16 %v254
        %v270 = vpack.c.b16 %v267, %v266
        %v271 = vpack.c.b16 %v269, %v268
        %vm274 = vcmask 261120
        %v276 = vsel %vm274, %v243, 0
        %v279 = vsel %vm274, %v244, 0
        %v282 = vsel %vm274, %v245, 0
        %v285 = vsel %vm274, %v246, 0
        %v288 = vsel %vm274, %v247, 0
        %v291 = vsel %vm274, %v248, 0
        %v294 = vsel %vm274, %v249, 0
        %v297 = vsel %vm274, %v250, 0
        %299 = vmatprep.subr.bf16.mxu0 0
        %300 = vmatpush1.bf16.msra.mxu0 %v270
        %301 = vmatprep.subr.bf16.mxu0 0
        %302 = vmatpush1.bf16.msra.mxu0 %v271
        %303 = vmatprep.subr.bf16.mxu0 0
        %304 = vmatpush1.bf16.msra.mxu0 0
        %305 = vmatprep.subr.bf16.mxu0 0
        %306 = vmatpush1.bf16.msra.mxu0 0
        %307 = vmatprep.subr.bf16.mxu0 0
        %308 = vmatpush1.bf16.msra.mxu0 0
        %309 = vmatprep.subr.bf16.mxu0 0
        %310 = vmatpush1.bf16.msra.mxu0 0
        %311 = vmatprep.subr.bf16.mxu0 0
        %312 = vmatpush1.bf16.msra.mxu0 0
        %313 = vmatprep.subr.bf16.mxu0 0
        %314 = vmatpush1.bf16.msra.mxu0 0
        %315 = vmatprep.subr.bf16.mxu0 0
        %316 = vmatpush1.bf16.msra.mxu0 0
        %317 = vmatprep.subr.bf16.mxu0 0
        %318 = vmatpush1.bf16.msra.mxu0 0
        %319 = vmatprep.subr.bf16.mxu0 0
        %320 = vmatpush1.bf16.msra.mxu0 0
        %321 = vmatprep.subr.bf16.mxu0 0
        %322 = vmatpush1.bf16.msra.mxu0 0
        %323 = vmatprep.subr.bf16.mxu0 0
        %324 = vmatpush1.bf16.msra.mxu0 0
        %325 = vmatprep.subr.bf16.mxu0 0
        %326 = vmatpush1.bf16.msra.mxu0 0
        %327 = vmatprep.subr.bf16.mxu0 0
        %328 = vmatpush1.bf16.msra.mxu0 0
        %329 = vmatprep.subr.bf16.mxu0 0
        %330 = vmatpush1.bf16.msra.mxu0 0
        %331 = vmatprep.mubr.bf16.mxu0 0
        %332 = vmatmul.mubr.bf16.gmra.mrb[0].mxu0 %v276
        %v333 = vpop.f32.mrb[0].mxu0
        %v334 = vadd.f32 %v260, %v333
        %v335 = vpop.f32.mrb[0].mxu0
        %v336 = vpop.f32.mrb[0].mxu0
        %v337 = vadd.f32 %v260, %v336
        %v338 = vpop.f32.mrb[0].mxu0
        %339 = vmatprep.mubr.bf16.mxu0 0
        %340 = vmatmul.mubr.bf16.gmra.mrb[0].mxu0 %v279
        %v341 = vpop.f32.mrb[0].mxu0
        %v342 = vadd.f32 %v260, %v341
        %v343 = vpop.f32.mrb[0].mxu0
        %v344 = vpop.f32.mrb[0].mxu0
        %v345 = vadd.f32 %v260, %v344
        %v346 = vpop.f32.mrb[0].mxu0
        %347 = vmatprep.mubr.bf16.mxu0 0
        %348 = vmatmul.mubr.bf16.gmra.mrb[0].mxu0 %v282
        %v349 = vpop.f32.mrb[0].mxu0
        %v350 = vadd.f32 %v260, %v349
        %v351 = vpop.f32.mrb[0].mxu0
        %v352 = vpop.f32.mrb[0].mxu0
        %v353 = vadd.f32 %v260, %v352
        %v354 = vpop.f32.mrb[0].mxu0
        %355 = vmatprep.mubr.bf16.mxu0 0
        %356 = vmatmul.mubr.bf16.gmra.mrb[0].mxu0 %v285
        %v357 = vpop.f32.mrb[0].mxu0
        %v358 = vadd.f32 %v260, %v357
        %v359 = vpop.f32.mrb[0].mxu0
        %v360 = vpop.f32.mrb[0].mxu0
        %v361 = vadd.f32 %v260, %v360
        %v362 = vpop.f32.mrb[0].mxu0
        %363 = vmatprep.mubr.bf16.mxu0 0
        %364 = vmatmul.mubr.bf16.gmra.mrb[0].mxu0 %v288
        %v365 = vpop.f32.mrb[0].mxu0
        %v366 = vadd.f32 %v260, %v365
        %v367 = vpop.f32.mrb[0].mxu0
        %v368 = vpop.f32.mrb[0].mxu0
        %v369 = vadd.f32 %v260, %v368
        %v370 = vpop.f32.mrb[0].mxu0
        %371 = vmatprep.mubr.bf16.mxu0 0
        %372 = vmatmul.mubr.bf16.gmra.mrb[0].mxu0 %v291
        %v373 = vpop.f32.mrb[0].mxu0
        %v374 = vadd.f32 %v260, %v373
        %v375 = vpop.f32.mrb[0].mxu0
        %v376 = vpop.f32.mrb[0].mxu0
        %v377 = vadd.f32 %v260, %v376
        %v378 = vpop.f32.mrb[0].mxu0
        %379 = vmatprep.mubr.bf16.mxu0 0
        %380 = vmatmul.mubr.bf16.gmra.mrb[0].mxu0 %v294
        %v381 = vpop.f32.mrb[0].mxu0
        %v382 = vadd.f32 %v260, %v381
        %v383 = vpop.f32.mrb[0].mxu0
        %v384 = vpop.f32.mrb[0].mxu0
        %v385 = vadd.f32 %v260, %v384
        %v386 = vpop.f32.mrb[0].mxu0
        %387 = vmatprep.mubr.bf16.mxu0 0
        %388 = vmatmul.mubr.bf16.gmra.mrb[0].mxu0 %v297
        %v389 = vpop.f32.mrb[0].mxu0
        %v390 = vadd.f32 %v260, %v389
        %v391 = vpop.f32.mrb[0].mxu0
        %v392 = vpop.f32.mrb[0].mxu0
        %v393 = vadd.f32 %v260, %v392
        %v394 = vpop.f32.mrb[0].mxu0
        %395 = vdwg.mxu0
        %v396 = vsub.f32 0.0, %v334
        %v397 = vsub.f32 0.0, %v337
        %v398 = vsub.f32 0.0, %v342
        %v399 = vsub.f32 0.0, %v345
        %v400 = vsub.f32 0.0, %v350
        %v401 = vsub.f32 0.0, %v353
        %v402 = vsub.f32 0.0, %v358
        %v403 = vsub.f32 0.0, %v361
        %v404 = vsub.f32 0.0, %v366
        %v405 = vsub.f32 0.0, %v369
        %v406 = vsub.f32 0.0, %v374
        %v407 = vsub.f32 0.0, %v377
        %v408 = vsub.f32 0.0, %v382
        %v409 = vsub.f32 0.0, %v385
        %v410 = vsub.f32 0.0, %v390
        %v411 = vsub.f32 0.0, %v393
        %v412 = vmul.f32 %v396, 1.442695
        %v413 = vpow.pop %v412
        %v414 = vmul.f32 %v397, 1.442695
        %v415 = vpow.pop %v414
        %v416 = vmul.f32 %v398, 1.442695
        %v417 = vpow.pop %v416
        %v418 = vmul.f32 %v399, 1.442695
        %v419 = vpow.pop %v418
        %v420 = vmul.f32 %v400, 1.442695
        %v421 = vpow.pop %v420
        %v422 = vmul.f32 %v401, 1.442695
        %v423 = vpow.pop %v422
        %v424 = vmul.f32 %v402, 1.442695
        %v425 = vpow.pop %v424
        %v426 = vmul.f32 %v403, 1.442695
        %v427 = vpow.pop %v426
        %v428 = vmul.f32 %v404, 1.442695
        %v429 = vpow.pop %v428
        %v430 = vmul.f32 %v405, 1.442695
        %v431 = vpow.pop %v430
        %v432 = vmul.f32 %v406, 1.442695
        %v433 = vpow.pop %v432
        %v434 = vmul.f32 %v407, 1.442695
        %v435 = vpow.pop %v434
        %v436 = vmul.f32 %v408, 1.442695
        %v437 = vpow.pop %v436
        %v438 = vmul.f32 %v409, 1.442695
        %v439 = vpow.pop %v438
        %v440 = vmul.f32 %v410, 1.442695
        %v441 = vpow.pop %v440
        %v442 = vmul.f32 %v411, 1.442695
        %v443 = vpow.pop %v442
        %v444 = vadd.f32 %v413, 1.0
        %v445 = vadd.f32 %v415, 1.0
        %v446 = vadd.f32 %v417, 1.0
        %v447 = vadd.f32 %v419, 1.0
        %v448 = vadd.f32 %v421, 1.0
        %v449 = vadd.f32 %v423, 1.0
        %v450 = vadd.f32 %v425, 1.0
        %v451 = vadd.f32 %v427, 1.0
        %v452 = vadd.f32 %v429, 1.0
        %v453 = vadd.f32 %v431, 1.0
        %v454 = vadd.f32 %v433, 1.0
        %v455 = vadd.f32 %v435, 1.0
        %v456 = vadd.f32 %v437, 1.0
        %v457 = vadd.f32 %v439, 1.0
        %v458 = vadd.f32 %v441, 1.0
        %v459 = vadd.f32 %v443, 1.0
        %v460 = vrcp.pop %v444
        %v461 = vrcp.pop %v445
        %v462 = vrcp.pop %v446
        %v463 = vrcp.pop %v447
        %v464 = vrcp.pop %v448
        %v465 = vrcp.pop %v449
        %v466 = vrcp.pop %v450
        %v467 = vrcp.pop %v451
        %v468 = vrcp.pop %v452
        %v469 = vrcp.pop %v453
        %v470 = vrcp.pop %v454
        %v471 = vrcp.pop %v455
        %v472 = vrcp.pop %v456
        %v473 = vrcp.pop %v457
        %v474 = vrcp.pop %v458
        %v475 = vrcp.pop %v459
        %v476 = vpack.c.bf16 %v461, %v460
        %v477 = vpack.c.bf16 %v463, %v462
        %v478 = vpack.c.bf16 %v465, %v464
        %v479 = vpack.c.bf16 %v467, %v466
        %v480 = vpack.c.bf16 %v469, %v468
        %v481 = vpack.c.bf16 %v471, %v470
        %v482 = vpack.c.bf16 %v473, %v472
        %v483 = vpack.c.bf16 %v475, %v474
        %v484 = vld [vmem:[%s3] sm:$0xf]
        %v485 = vld [vmem:[%s3 + $0x4] sm:$0xf]
        %v486 = vld [vmem:[%s3 + $0x8] sm:$0xf]
        %v487 = vld [vmem:[%s3 + $0xc] sm:$0xf]
        %v488 = vld [vmem:[%s3 + $0x10] sm:$0xf]
        %v489 = vld [vmem:[%s3 + $0x14] sm:$0xf]
        %v490 = vld [vmem:[%s3 + $0x18] sm:$0xf]
        %v491 = vld [vmem:[%s3 + $0x1c] sm:$0xf]
        %v492 = vld [vmem:[%s3 + $0x20] sm:$0xf]
        %v493 = vld [vmem:[%s3 + $0x24] sm:$0xf]
        %v494 = vld [vmem:[%s3 + $0x28] sm:$0xf]
        %v495 = vld [vmem:[%s3 + $0x2c] sm:$0xf]
        %v496 = vld [vmem:[%s3 + $0x30] sm:$0xf]
        %v497 = vld [vmem:[%s3 + $0x34] sm:$0xf]
        %v498 = vld [vmem:[%s3 + $0x38] sm:$0xf]
        %v499 = vld [vmem:[%s3 + $0x3c] sm:$0xf]
        %v500 = vld [vmem:[%s4] sm:$0x1]
        %v502 = vlaneseq
        %v503 = vshrl.u32 %v502, 7
        %v504 = vsub.s32 0, %v503
        %v505 = vrot.slane %v500, %v504
        %v523 = vunpack.c.l.b16 %v484
        %v524 = vunpack.c.l.b16 %v485
        %v525 = vunpack.c.l.b16 %v486
        %v526 = vunpack.c.l.b16 %v487
        %v527 = vunpack.c.l.b16 %v488
        %v528 = vunpack.c.l.b16 %v489
        %v529 = vunpack.c.l.b16 %v490
        %v530 = vunpack.c.l.b16 %v491
        %v531 = vunpack.c.l.b16 %v492
        %v532 = vunpack.c.l.b16 %v493
        %v533 = vunpack.c.l.b16 %v494
        %v534 = vunpack.c.l.b16 %v495
        %v535 = vunpack.c.l.b16 %v496
        %v536 = vunpack.c.l.b16 %v497
        %v537 = vunpack.c.l.b16 %v498
        %v538 = vunpack.c.l.b16 %v499
        %v539 = vpack.c.b16 %v524, %v523
        %v540 = vpack.c.b16 %v526, %v525
        %v541 = vpack.c.b16 %v528, %v527
        %v542 = vpack.c.b16 %v530, %v529
        %v543 = vpack.c.b16 %v532, %v531
        %v544 = vpack.c.b16 %v534, %v533
        %v545 = vpack.c.b16 %v536, %v535
        %v546 = vpack.c.b16 %v538, %v537
        %555 = vmatprep.subr.bf16.mxu0 0
        %556 = vmatpush1.bf16.msra.mxu0 %v539
        %557 = vmatprep.subr.bf16.mxu0 0
        %558 = vmatpush1.bf16.msra.mxu0 %v540
        %559 = vmatprep.subr.bf16.mxu0 0
        %560 = vmatpush1.bf16.msra.mxu0 %v541
        %561 = vmatprep.subr.bf16.mxu0 0
        %562 = vmatpush1.bf16.msra.mxu0 %v542
        %563 = vmatprep.subr.bf16.mxu0 0
        %564 = vmatpush1.bf16.msra.mxu0 %v543
        %565 = vmatprep.subr.bf16.mxu0 0
        %566 = vmatpush1.bf16.msra.mxu0 %v544
        %567 = vmatprep.subr.bf16.mxu0 0
        %568 = vmatpush1.bf16.msra.mxu0 %v545
        %569 = vmatprep.subr.bf16.mxu0 0
        %570 = vmatpush1.bf16.msra.mxu0 %v546
        %571 = vmatprep.subr.bf16.mxu0 0
        %572 = vmatpush1.bf16.msra.mxu0 0
        %573 = vmatprep.subr.bf16.mxu0 0
        %574 = vmatpush1.bf16.msra.mxu0 0
        %575 = vmatprep.subr.bf16.mxu0 0
        %576 = vmatpush1.bf16.msra.mxu0 0
        %577 = vmatprep.subr.bf16.mxu0 0
        %578 = vmatpush1.bf16.msra.mxu0 0
        %579 = vmatprep.subr.bf16.mxu0 0
        %580 = vmatpush1.bf16.msra.mxu0 0
        %581 = vmatprep.subr.bf16.mxu0 0
        %582 = vmatpush1.bf16.msra.mxu0 0
        %583 = vmatprep.subr.bf16.mxu0 0
        %584 = vmatpush1.bf16.msra.mxu0 0
        %585 = vmatprep.subr.bf16.mxu0 0
        %586 = vmatpush1.bf16.msra.mxu0 0
        %587 = vmatprep.mubr.bf16.mxu0 0
        %588 = vmatmul.mubr.bf16.gmra.mrb[0].mxu0 %v476
        %v589 = vpop.f32.mrb[0].mxu0
        %v590 = vadd.f32 %v505, %v589
        %v591 = vpop.f32.mrb[0].mxu0
        %v592 = vpop.f32.mrb[0].mxu0
        %v593 = vadd.f32 %v505, %v592
        %v594 = vpop.f32.mrb[0].mxu0
        %595 = vmatprep.mubr.bf16.mxu0 0
        %596 = vmatmul.mubr.bf16.gmra.mrb[0].mxu0 %v477
        %v597 = vpop.f32.mrb[0].mxu0
        %v598 = vadd.f32 %v505, %v597
        %v599 = vpop.f32.mrb[0].mxu0
        %v600 = vpop.f32.mrb[0].mxu0
        %v601 = vadd.f32 %v505, %v600
        %v602 = vpop.f32.mrb[0].mxu0
        %603 = vmatprep.mubr.bf16.mxu0 0
        %604 = vmatmul.mubr.bf16.gmra.mrb[0].mxu0 %v478
        %v605 = vpop.f32.mrb[0].mxu0
        %v606 = vadd.f32 %v505, %v605
        %v607 = vpop.f32.mrb[0].mxu0
        %v608 = vpop.f32.mrb[0].mxu0
        %v609 = vadd.f32 %v505, %v608
        %v610 = vpop.f32.mrb[0].mxu0
        %611 = vmatprep.mubr.bf16.mxu0 0
        %612 = vmatmul.mubr.bf16.gmra.mrb[0].mxu0 %v479
        %v613 = vpop.f32.mrb[0].mxu0
        %v614 = vadd.f32 %v505, %v613
        %v615 = vpop.f32.mrb[0].mxu0
        %v616 = vpop.f32.mrb[0].mxu0
        %v617 = vadd.f32 %v505, %v616
        %v618 = vpop.f32.mrb[0].mxu0
        %619 = vmatprep.mubr.bf16.mxu0 0
        %620 = vmatmul.mubr.bf16.gmra.mrb[0].mxu0 %v480
        %v621 = vpop.f32.mrb[0].mxu0
        %v622 = vadd.f32 %v505, %v621
        %v623 = vpop.f32.mrb[0].mxu0
        %v624 = vpop.f32.mrb[0].mxu0
        %v625 = vadd.f32 %v505, %v624
        %v626 = vpop.f32.mrb[0].mxu0
        %627 = vmatprep.mubr.bf16.mxu0 0
        %628 = vmatmul.mubr.bf16.gmra.mrb[0].mxu0 %v481
        %v629 = vpop.f32.mrb[0].mxu0
        %v630 = vadd.f32 %v505, %v629
        %v631 = vpop.f32.mrb[0].mxu0
        %v632 = vpop.f32.mrb[0].mxu0
        %v633 = vadd.f32 %v505, %v632
        %v634 = vpop.f32.mrb[0].mxu0
        %635 = vmatprep.mubr.bf16.mxu0 0
        %636 = vmatmul.mubr.bf16.gmra.mrb[0].mxu0 %v482
        %v637 = vpop.f32.mrb[0].mxu0
        %v638 = vadd.f32 %v505, %v637
        %v639 = vpop.f32.mrb[0].mxu0
        %v640 = vpop.f32.mrb[0].mxu0
        %v641 = vadd.f32 %v505, %v640
        %v642 = vpop.f32.mrb[0].mxu0
        %643 = vmatprep.mubr.bf16.mxu0 0
        %644 = vmatmul.mubr.bf16.gmra.mrb[0].mxu0 %v483
        %v645 = vpop.f32.mrb[0].mxu0
        %v646 = vadd.f32 %v505, %v645
        %v647 = vpop.f32.mrb[0].mxu0
        %v648 = vpop.f32.mrb[0].mxu0
        %v649 = vadd.f32 %v505, %v648
        %v650 = vpop.f32.mrb[0].mxu0
        %651 = vdwg.mxu0
        %652 = vst [vmem:[%s218] sm:$0xff] %v590
        %653 = vst [vmem:[%s218 + $0x8] sm:$0xff] %v593
        %654 = vst [vmem:[%s218 + $0x10] sm:$0xff] %v598
        %655 = vst [vmem:[%s218 + $0x18] sm:$0xff] %v601
        %656 = vst [vmem:[%s218 + $0x20] sm:$0xff] %v606
        %657 = vst [vmem:[%s218 + $0x28] sm:$0xff] %v609
        %658 = vst [vmem:[%s218 + $0x30] sm:$0xff] %v614
        %659 = vst [vmem:[%s218 + $0x38] sm:$0xff] %v617
        %660 = vst [vmem:[%s218 + $0x40] sm:$0xff] %v622
        %661 = vst [vmem:[%s218 + $0x48] sm:$0xff] %v625
        %662 = vst [vmem:[%s218 + $0x50] sm:$0xff] %v630
        %663 = vst [vmem:[%s218 + $0x58] sm:$0xff] %v633
        %664 = vst [vmem:[%s218 + $0x60] sm:$0xff] %v638
        %665 = vst [vmem:[%s218 + $0x68] sm:$0xff] %v641
        %666 = vst [vmem:[%s218 + $0x70] sm:$0xff] %v646
        %667 = vst [vmem:[%s218 + $0x78] sm:$0xff] %v649
        %s668 = sand.u32 %s137, 1
        %s669 = scalar_lea.sflag [#allocation3], %s668
        %s670 = sand.u32 %s137, 1
        %s671 = smul.addr %s670, 128
        %s672 = scalar_lea.vmem [#allocation2], %s671
        // Predicated region
        $region41: #{tpu_custom_call.1} parent=39 // pred_check
          %p673 = pneg %p147
        $region42: #{tpu_custom_call.1} parent=39 // pred_check_branch
          %675 = sbr.rel (%p673) target = $region44
        $region43: #{tpu_custom_call.1} parent=39 // pred_region
          %s676 = smul.u32 16, %s19
          %s678 = ssub.s32 2048, 2048
          %679 = vsyncadd %s669, %s678
          %s680 = smul.addr %s676, 128
          %s681 = scalar_lea.hbm %s5, %s680
          %s682 = sshll.u32 %s672, 4
          %s683 = int_to_ptr.vmem [resolvable:$true] %s682
          %688 = dma.vmem_to_hbm [thread:$0]  %s683, 2048, %s681, %s669, 128, 128, 8
        $region44: #{tpu_custom_call.1} parent=39 // pred_fallthru
          _
      $region40: #{tpu_custom_call.1} parent=5 // pred_fallthru
        _
      %p689 = scmp.le.s32.totalorder 2, %s14
      // Predicated region
      $region45: #{tpu_custom_call.1} parent=5 // pred_check
        %p690 = pneg %p689
      $region46: #{tpu_custom_call.1} parent=5 // pred_check_branch
        %692 = sbr.rel (%p690) target = $region48
      $region47: #{tpu_custom_call.1} parent=5 // pred_region
        %s693 = ssub.s32 %s14, 2
        // Predicated region
        $region49: #{tpu_custom_call.1} parent=47 // pred_check
          %p694 = pneg %p153
        $region50: #{tpu_custom_call.1} parent=47 // pred_check_branch
          %696 = sbr.rel (%p694) target = $region52
        $region51: #{tpu_custom_call.1} parent=47 // pred_region
          %s697 = sand.u32 %s138, 1
          %s698 = scalar_lea.sflag [#allocation3], %s697
          %s699 = sand.u32 %s138, 1
          %s700 = smul.addr %s699, 128
          %s701 = scalar_lea.vmem [#allocation2], %s700
          %702 = dma.done %s698, 2048
        $region52: #{tpu_custom_call.1} parent=47 // pred_fallthru
          _
      $region48: #{tpu_custom_call.1} parent=5 // pred_fallthru
        _
    $region6: #{tpu_custom_call.1} parent=1 // loop_footer
      %s18 = sadd.s32 1, %s14
    $region7: #{tpu_custom_call.1} parent=1 // loop_footer_branch
      %13 = sbr.rel target = $region3
    $region8: #{tpu_custom_call.1} parent=1 // loop_exit
      _
    %703 = vsyncpa [#allocation3], 1
    %s704 = scalar_lea.sflag [#allocation3], 1
    %705 = vsyncpa %s704, 1

</llo_original>
